<compile_context>
chip_gen: v7x
topology: tpu7x:2x2x1
jax: 0.10.0
libtpu: 0.0.40
codegen_flags: <defaults>
</compile_context>

<pallas_src>
import functools

import jax
import jax.numpy as jnp
from jax.experimental import pallas as pl
from jax.experimental.pallas import tpu as pltpu


def attention_head_kernel(x_ref, w_ref, tril_ref, o_ref, *,
                          head_size, matmul_dtype, fuse_qkv):
    # x_ref:    (Bt, T, C)        block of batch elements
    # w_ref:    (C, 3H) if fuse_qkv else (3, C, H)   (resident across the grid)
    # tril_ref: (T, T) f32        causal buffer (resident across the grid)
    # o_ref:    (Bt, T, H)
    Bt, T, C = x_ref.shape
    H = head_size
    md = matmul_dtype
    scale = C ** -0.5  # PyTorch source scales by the embedding dim C (kept as-is)

    # Fuse batch and sequence into one matmul M dimension.
    x2d = x_ref[...].reshape(Bt * T, C).astype(md)

    if fuse_qkv:
        # One fused projection pass: (Bt*T, C) @ (C, 3H), f32 accumulation.
        kqv = jnp.dot(x2d, w_ref[...].astype(md),
                      preferred_element_type=jnp.float32)
        kqv = kqv.reshape(Bt, T, 3 * H)
        # Slice k/q/v and cast to matmul_dtype exactly once; fold the score
        # scale into q so the VPU multiply is over Bt*T*H, not Bt*T*T.
        k = kqv[:, :, 0:H].astype(md)
        q = (kqv[:, :, H:2 * H] * scale).astype(md)
        v = kqv[:, :, 2 * H:3 * H].astype(md)
    else:
        wk = w_ref[0].astype(md)
        wq = w_ref[1].astype(md)
        wv = w_ref[2].astype(md)
        k = jnp.dot(x2d, wk, preferred_element_type=jnp.float32
                    ).reshape(Bt, T, H).astype(md)
        q = (jnp.dot(x2d, wq, preferred_element_type=jnp.float32
                     ).reshape(Bt, T, H) * scale).astype(md)
        v = jnp.dot(x2d, wv, preferred_element_type=jnp.float32
                    ).reshape(Bt, T, H).astype(md)

    # Scores: contraction on the LAST axis of both operands (no explicit k
    # transpose). NOTE: lowers to an MXU matmul with a transposed-operand load;
    # verify with pl.lower_as_mlir if retuning on a new Mosaic version.
    wei = jnp.einsum("bqh,bkh->bqk", q, k,
                     preferred_element_type=jnp.float32)       # (Bt, T, T) f32

    # Causal mask from the resident tril buffer (broadcast over the batch blk).
    wei = jnp.where(tril_ref[...] != 0, wei, -jnp.inf)

    # Numerically stable softmax in f32 (EUP approx reciprocal for the denom;
    # rows don't sum to exactly 1 -- fine for inference).
    wei = wei - jnp.max(wei, axis=-1, keepdims=True)
    p = jnp.exp(wei)
    p = p * pl.reciprocal(jnp.sum(p, axis=-1, keepdims=True), approx=True)

    # out = softmax(scores) @ v, batched over the block.
    out = jnp.einsum("bqk,bkh->bqh", p.astype(md), v,
                     preferred_element_type=jnp.float32)       # (Bt, T, H)
    o_ref[...] = out.astype(o_ref.dtype)


def _pick_block_b(B, T, C, H, vmem_budget_bytes):
    """Largest divisor of B whose rough per-step live set fits the budget while
    keeping >= 2 grid steps (so both v7x TensorCores get work and the DMA
    pipeline has something to overlap with)."""
    def live_bytes(bb):
        # f32 upper bound per step: double-buffered x block, fused kqv + q/k/v,
        # (T, T) scores (+exp temp), double-buffered output.
        return 4 * bb * T * (4 * C + 9 * H + 2 * T)

    divisors = [d for d in range(1, B + 1) if B % d == 0]
    fitting = [d for d in divisors if live_bytes(d) <= vmem_budget_bytes]
    multi_step = [d for d in fitting if B // d >= 2]
    if multi_step:
        return max(multi_step)
    if fitting:
        return max(fitting)
    return 1


def attention_head(x, wk, wq, wv, *, block_b=None, matmul_dtype=jnp.float32,
                   fuse_qkv=True, vmem_limit_bytes=48 * 1024 * 1024):
    """x: (B, T, C); wk/wq/wv: (C, H). Returns (B, T, H).

    block_b:      batch elements per grid step. Defaults to the largest divisor
                  of B that fits the VMEM budget and leaves >= 2 grid steps.
    matmul_dtype: MXU operand dtype (accumulation is always f32; softmax stays
                  in f32). bf16 is recommended on ALL generations — v5e's MXU
                  is natively bf16, so f32 operands cost multiple passes.
    fuse_qkv:     use the fused (C, 3H) projection (recommended).
    vmem_limit_bytes: explicit scoped-VMEM budget. 48 MiB is safe on v7x
                  (64 MiB physical); raise to ~96 MiB on v5e/v6e for larger
                  batch blocks.
    """
    B, T, C = x.shape
    H = wk.shape[1]

    if block_b is None:
        block_b = _pick_block_b(B, T, C, H, vmem_limit_bytes - (8 << 20))
    assert B % block_b == 0, (B, block_b)
    grid = (B // block_b,)

    # Causal buffer (same as the PyTorch registered `tril`), resident in VMEM.
    tril = jnp.tril(jnp.ones((T, T), jnp.float32))

    if fuse_qkv:
        w = jnp.concatenate([wk, wq, wv], axis=1)                   # (C, 3H)
        w_spec = pl.BlockSpec((C, 3 * H), lambda b: (0, 0))
    else:
        w = jnp.stack([wk, wq, wv], axis=0)                          # (3, C, H)
        w_spec = pl.BlockSpec((3, C, H), lambda b: (0, 0, 0))

    kernel = functools.partial(attention_head_kernel, head_size=H,
                               matmul_dtype=matmul_dtype, fuse_qkv=fuse_qkv)
    return pl.pallas_call(
        kernel,
        out_shape=jax.ShapeDtypeStruct((B, T, H), x.dtype),
        grid_spec=pltpu.PrefetchScalarGridSpec(
            num_scalar_prefetch=0,
            grid=grid,
            in_specs=[
                pl.BlockSpec((block_b, T, C), lambda b: (b, 0, 0)),   # x block
                w_spec,                                               # weights
                pl.BlockSpec((T, T), lambda b: (0, 0)),               # tril
            ],
            out_specs=pl.BlockSpec((block_b, T, H), lambda b: (b, 0, 0)),
        ),
        compiler_params=pltpu.CompilerParams(
            dimension_semantics=("parallel",),
            vmem_limit_bytes=vmem_limit_bytes),
    )(x, w, tril)


def reference_attention_head(x, wk, wq, wv):
    """Pure-JAX reference mirroring the PyTorch forward (eval mode)."""
    B, T, C = x.shape
    k = x @ wk
    q = x @ wq
    v = x @ wv
    wei = jnp.einsum("bth,bsh->bts", q, k) * (C ** -0.5)
    mask = jnp.tril(jnp.ones((T, T), dtype=bool))
    wei = jnp.where(mask, wei, -jnp.inf)
    wei = jax.nn.softmax(wei, axis=-1)
    return jnp.einsum("bts,bsh->bth", wei, v)


if __name__ == "__main__":
    # Small, module-consistent shapes.
    B, T = 2, 8            # batch, sequence length (block_size = 8)
    n_embd = 32            # C
    head_size = 16         # H

    key = jax.random.PRNGKey(0)
    kx, kk, kq, kv = jax.random.split(key, 4)

    x = jax.random.normal(kx, (B, T, n_embd), dtype=jnp.float32)
    # Deterministic weight init (stand-in for nn.Linear's init); stored (C, H).
    scale = 1.0 / jnp.sqrt(n_embd)
    wk = jax.random.uniform(kk, (n_embd, head_size), jnp.float32, -scale, scale)
    wq = jax.random.uniform(kq, (n_embd, head_size), jnp.float32, -scale, scale)
    wv = jax.random.uniform(kv, (n_embd, head_size), jnp.float32, -scale, scale)

    ref = reference_attention_head(x, wk, wq, wv)

    fuse = True
    try:
        out = jax.block_until_ready(attention_head(x, wk, wq, wv, fuse_qkv=True))
    except Exception:
        # TODO(synk): some Mosaic versions reject sub-128-lane value slices of
        # the fused QKV result; fall back to three separate projection dots.
        fuse = False
        out = jax.block_until_ready(attention_head(x, wk, wq, wv, fuse_qkv=False))

    assert out.shape == (B, T, head_size), out.shape
    # Tolerance slightly relaxed vs. exact reference: EUP approximate
    # reciprocal in the softmax denominator.
    assert jnp.allclose(out, ref, atol=2e-3, rtol=2e-3), \
        f"f32 max err {jnp.max(jnp.abs(out - ref))}"

    # bf16 MXU operands + f32 accumulation (fast path on all generations).
    out_bf16 = jax.block_until_ready(
        attention_head(x, wk, wq, wv, matmul_dtype=jnp.bfloat16, fuse_qkv=fuse))
    assert jnp.allclose(out_bf16, ref, atol=5e-2, rtol=5e-2), \
        f"bf16 max err {jnp.max(jnp.abs(out_bf16 - ref))}"

    print("KERNEL_OK")
</pallas_src>

<mosaic_0001>
module attributes {stable_mosaic.version = 11 : i64} {
  func.func @attention_head_kernel(%arg0: i32, %arg1: memref<1x8x32xf32, #tpu.memory_space<vmem>>, %arg2: memref<32x48xf32, #tpu.memory_space<vmem>>, %arg3: memref<8x8xf32, #tpu.memory_space<vmem>>, %arg4: memref<1x8x16xf32, #tpu.memory_space<vmem>>) attributes {dimension_semantics = [#tpu.dimension_semantics<parallel>], iteration_bounds = array<i64: 2>, scalar_prefetch = 0 : i64, scratch_operands = 0 : i64, tpu.core_type = #tpu.core_type<tc>, window_params = [{transform_indices = @transform_0, window_bounds = array<i64: 1, 8, 32>}, {pipeline_mode = #tpu.pipeline_mode<synchronous>, transform_indices = @transform_1, window_bounds = array<i64: 32, 48>}, {pipeline_mode = #tpu.pipeline_mode<synchronous>, transform_indices = @transform_2, window_bounds = array<i64: 8, 8>}, {transform_indices = @transform_3, window_bounds = array<i64: 1, 8, 16>}]} {
    %c0 = arith.constant 0 : index
    %c0_0 = arith.constant 0 : index
    %c0_1 = arith.constant 0 : index
    %0 = vector.load %arg1[%c0, %c0_0, %c0_1] : memref<1x8x32xf32, #tpu.memory_space<vmem>>, vector<1x8x32xf32>
    %1 = vector.shape_cast %0 : vector<1x8x32xf32> to vector<8x32xf32>
    %c0_2 = arith.constant 0 : index
    %c0_3 = arith.constant 0 : index
    %2 = vector.load %arg2[%c0_2, %c0_3] : memref<32x48xf32, #tpu.memory_space<vmem>>, vector<32x48xf32>
    %cst = arith.constant dense<0.000000e+00> : vector<8x48xf32>
    %3 = tpu.matmul %1, %2, %cst {dimension_numbers = #tpu.dot_dimension_numbers<[1], [0], [0], [1], [0, 0, 1, 1], [], []>} : vector<8x32xf32>, vector<32x48xf32>, vector<8x48xf32> -> vector<8x48xf32>
    %4 = vector.shape_cast %3 : vector<8x48xf32> to vector<1x8x48xf32>
    %5 = vector.extract_strided_slice %4 {offsets = [0, 0, 0], sizes = [1, 8, 16], strides = [1, 1, 1]} : vector<1x8x48xf32> to vector<1x8x16xf32>
    %6 = vector.extract_strided_slice %4 {offsets = [0, 0, 16], sizes = [1, 8, 16], strides = [1, 1, 1]} : vector<1x8x48xf32> to vector<1x8x16xf32>
    %cst_4 = arith.constant 0.176776692 : f32
    %7 = vector.broadcast %cst_4 : f32 to vector<1x8x16xf32>
    %8 = arith.mulf %6, %7 : vector<1x8x16xf32>
    %9 = vector.extract_strided_slice %4 {offsets = [0, 0, 32], sizes = [1, 8, 16], strides = [1, 1, 1]} : vector<1x8x48xf32> to vector<1x8x16xf32>
    "tpu.trace_start"() <{level = 10 : i32, message = "bqh,bkh->bqk"}> : () -> ()
    %cst_5 = arith.constant dense<0.000000e+00> : vector<1x8x8xf32>
    %10 = tpu.matmul %8, %5, %cst_5 {dimension_numbers = #tpu.dot_dimension_numbers<[2], [2], [1], [1], [0, 0, 0, 1, 1, 1], [0], [0]>} : vector<1x8x16xf32>, vector<1x8x16xf32>, vector<1x8x8xf32> -> vector<1x8x8xf32>
    "tpu.trace_stop"() : () -> ()
    %c0_6 = arith.constant 0 : index
    %c0_7 = arith.constant 0 : index
    %11 = vector.load %arg3[%c0_6, %c0_7] : memref<8x8xf32, #tpu.memory_space<vmem>>, vector<8x8xf32>
    %cst_8 = arith.constant 0.000000e+00 : f32
    %12 = vector.broadcast %cst_8 : f32 to vector<8x8xf32>
    %13 = arith.cmpf one, %11, %12 : vector<8x8xf32>
    %cst_9 = arith.constant 0xFF800000 : f32
    %14 = vector.shape_cast %13 : vector<8x8xi1> to vector<1x8x8xi1>
    %15 = vector.broadcast %cst_9 : f32 to vector<1x8x8xf32>
    %16 = arith.select %14, %10, %15 : vector<1x8x8xi1>, vector<1x8x8xf32>
    %cst_10 = arith.constant dense<0xFF800000> : vector<1x8xf32>
    %17 = vector.multi_reduction <maximumf>, %16, %cst_10 [2] : vector<1x8x8xf32> to vector<1x8xf32>
    %18 = vector.shape_cast %17 : vector<1x8xf32> to vector<1x8x1xf32>
    %19 = vector.broadcast %18 : vector<1x8x1xf32> to vector<1x8x8xf32>
    %20 = arith.subf %16, %19 : vector<1x8x8xf32>
    %21 = math.exp %20 : vector<1x8x8xf32>
    %cst_11 = arith.constant dense<0.000000e+00> : vector<1x8xf32>
    %22 = vector.multi_reduction <add>, %21, %cst_11 [2] : vector<1x8x8xf32> to vector<1x8xf32>
    %23 = vector.shape_cast %22 : vector<1x8xf32> to vector<1x8x1xf32>
    %24 = tpu.reciprocal %23 {approx = true} : vector<1x8x1xf32> -> vector<1x8x1xf32>
    %25 = vector.broadcast %24 : vector<1x8x1xf32> to vector<1x8x8xf32>
    %26 = arith.mulf %21, %25 : vector<1x8x8xf32>
    "tpu.trace_start"() <{level = 10 : i32, message = "bqk,bkh->bqh"}> : () -> ()
    %cst_12 = arith.constant dense<0.000000e+00> : vector<1x8x16xf32>
    %27 = tpu.matmul %26, %9, %cst_12 {dimension_numbers = #tpu.dot_dimension_numbers<[2], [1], [1], [2], [0, 0, 0, 1, 1, 2], [0], [0]>} : vector<1x8x8xf32>, vector<1x8x16xf32>, vector<1x8x16xf32> -> vector<1x8x16xf32>
    "tpu.trace_stop"() : () -> ()
    %c0_13 = arith.constant 0 : index
    %c0_14 = arith.constant 0 : index
    %c0_15 = arith.constant 0 : index
    %28 = vector.load %arg4[%c0_13, %c0_14, %c0_15] : memref<1x8x16xf32, #tpu.memory_space<vmem>>, vector<1x8x16xf32>
    tpu.vector_store %arg4[%c0_13, %c0_14, %c0_15], %27 {strides = array<i32>} : memref<1x8x16xf32, #tpu.memory_space<vmem>>, vector<1x8x16xf32>,
    return
  }
  func.func @transform_0(%arg0: i32) -> (i32, i32, i32) {
    %c0_i32 = arith.constant 0 : i32
    %c0_i32_0 = arith.constant 0 : i32
    %c0_i32_1 = arith.constant 0 : i32
    return %arg0, %c0_i32, %c0_i32_0 : i32, i32, i32
  }
  func.func @transform_1(%arg0: i32) -> (i32, i32) {
    %c0_i32 = arith.constant 0 : i32
    %c0_i32_0 = arith.constant 0 : i32
    %c0_i32_1 = arith.constant 0 : i32
    return %c0_i32, %c0_i32_0 : i32, i32
  }
  func.func @transform_2(%arg0: i32) -> (i32, i32) {
    %c0_i32 = arith.constant 0 : i32
    %c0_i32_0 = arith.constant 0 : i32
    %c0_i32_1 = arith.constant 0 : i32
    return %c0_i32, %c0_i32_0 : i32, i32
  }
  func.func @transform_3(%arg0: i32) -> (i32, i32, i32) {
    %c0_i32 = arith.constant 0 : i32
    %c0_i32_0 = arith.constant 0 : i32
    %c0_i32_1 = arith.constant 0 : i32
    return %arg0, %c0_i32, %c0_i32_0 : i32, i32, i32
  }
}

module attributes {stable_mosaic.version = 11 : i64} {
  func.func @attention_head_kernel(%arg0: i32, %arg1: memref<1x8x32xf32, #tpu.memory_space<vmem>>, %arg2: memref<3x32x16xf32, #tpu.memory_space<vmem>>, %arg3: memref<8x8xf32, #tpu.memory_space<vmem>>, %arg4: memref<1x8x16xf32, #tpu.memory_space<vmem>>) attributes {dimension_semantics = [#tpu.dimension_semantics<parallel>], iteration_bounds = array<i64: 2>, scalar_prefetch = 0 : i64, scratch_operands = 0 : i64, tpu.core_type = #tpu.core_type<tc>, window_params = [{transform_indices = @transform_0, window_bounds = array<i64: 1, 8, 32>}, {pipeline_mode = #tpu.pipeline_mode<synchronous>, transform_indices = @transform_1, window_bounds = array<i64: 3, 32, 16>}, {pipeline_mode = #tpu.pipeline_mode<synchronous>, transform_indices = @transform_2, window_bounds = array<i64: 8, 8>}, {transform_indices = @transform_3, window_bounds = array<i64: 1, 8, 16>}]} {
    %c0 = arith.constant 0 : index
    %c0_0 = arith.constant 0 : index
    %c0_1 = arith.constant 0 : index
    %0 = vector.load %arg1[%c0, %c0_0, %c0_1] : memref<1x8x32xf32, #tpu.memory_space<vmem>>, vector<1x8x32xf32>
    %1 = vector.shape_cast %0 : vector<1x8x32xf32> to vector<8x32xf32>
    %c0_2 = arith.constant 0 : index
    %c0_3 = arith.constant 0 : index
    %c0_4 = arith.constant 0 : index
    %2 = vector.load %arg2[%c0_2, %c0_3, %c0_4] : memref<3x32x16xf32, #tpu.memory_space<vmem>>, vector<1x32x16xf32>
    %3 = vector.shape_cast %2 : vector<1x32x16xf32> to vector<32x16xf32>
    %c1 = arith.constant 1 : index
    %c0_5 = arith.constant 0 : index
    %c0_6 = arith.constant 0 : index
    %4 = vector.load %arg2[%c1, %c0_5, %c0_6] : memref<3x32x16xf32, #tpu.memory_space<vmem>>, vector<1x32x16xf32>
    %5 = vector.shape_cast %4 : vector<1x32x16xf32> to vector<32x16xf32>
    %c2 = arith.constant 2 : index
    %c0_7 = arith.constant 0 : index
    %c0_8 = arith.constant 0 : index
    %6 = vector.load %arg2[%c2, %c0_7, %c0_8] : memref<3x32x16xf32, #tpu.memory_space<vmem>>, vector<1x32x16xf32>
    %7 = vector.shape_cast %6 : vector<1x32x16xf32> to vector<32x16xf32>
    %cst = arith.constant dense<0.000000e+00> : vector<8x16xf32>
    %8 = tpu.matmul %1, %3, %cst {dimension_numbers = #tpu.dot_dimension_numbers<[1], [0], [0], [1], [0, 0, 1, 1], [], []>} : vector<8x32xf32>, vector<32x16xf32>, vector<8x16xf32> -> vector<8x16xf32>
    %9 = vector.shape_cast %8 : vector<8x16xf32> to vector<1x8x16xf32>
    %cst_9 = arith.constant dense<0.000000e+00> : vector<8x16xf32>
    %10 = tpu.matmul %1, %5, %cst_9 {dimension_numbers = #tpu.dot_dimension_numbers<[1], [0], [0], [1], [0, 0, 1, 1], [], []>} : vector<8x32xf32>, vector<32x16xf32>, vector<8x16xf32> -> vector<8x16xf32>
    %11 = vector.shape_cast %10 : vector<8x16xf32> to vector<1x8x16xf32>
    %cst_10 = arith.constant 0.176776692 : f32
    %12 = vector.broadcast %cst_10 : f32 to vector<1x8x16xf32>
    %13 = arith.mulf %11, %12 : vector<1x8x16xf32>
    %cst_11 = arith.constant dense<0.000000e+00> : vector<8x16xf32>
    %14 = tpu.matmul %1, %7, %cst_11 {dimension_numbers = #tpu.dot_dimension_numbers<[1], [0], [0], [1], [0, 0, 1, 1], [], []>} : vector<8x32xf32>, vector<32x16xf32>, vector<8x16xf32> -> vector<8x16xf32>
    %15 = vector.shape_cast %14 : vector<8x16xf32> to vector<1x8x16xf32>
    "tpu.trace_start"() <{level = 10 : i32, message = "bqh,bkh->bqk"}> : () -> ()
    %cst_12 = arith.constant dense<0.000000e+00> : vector<1x8x8xf32>
    %16 = tpu.matmul %13, %9, %cst_12 {dimension_numbers = #tpu.dot_dimension_numbers<[2], [2], [1], [1], [0, 0, 0, 1, 1, 1], [0], [0]>} : vector<1x8x16xf32>, vector<1x8x16xf32>, vector<1x8x8xf32> -> vector<1x8x8xf32>
    "tpu.trace_stop"() : () -> ()
    %c0_13 = arith.constant 0 : index
    %c0_14 = arith.constant 0 : index
    %17 = vector.load %arg3[%c0_13, %c0_14] : memref<8x8xf32, #tpu.memory_space<vmem>>, vector<8x8xf32>
    %cst_15 = arith.constant 0.000000e+00 : f32
    %18 = vector.broadcast %cst_15 : f32 to vector<8x8xf32>
    %19 = arith.cmpf one, %17, %18 : vector<8x8xf32>
    %cst_16 = arith.constant 0xFF800000 : f32
    %20 = vector.shape_cast %19 : vector<8x8xi1> to vector<1x8x8xi1>
    %21 = vector.broadcast %cst_16 : f32 to vector<1x8x8xf32>
    %22 = arith.select %20, %16, %21 : vector<1x8x8xi1>, vector<1x8x8xf32>
    %cst_17 = arith.constant dense<0xFF800000> : vector<1x8xf32>
    %23 = vector.multi_reduction <maximumf>, %22, %cst_17 [2] : vector<1x8x8xf32> to vector<1x8xf32>
    %24 = vector.shape_cast %23 : vector<1x8xf32> to vector<1x8x1xf32>
    %25 = vector.broadcast %24 : vector<1x8x1xf32> to vector<1x8x8xf32>
    %26 = arith.subf %22, %25 : vector<1x8x8xf32>
    %27 = math.exp %26 : vector<1x8x8xf32>
    %cst_18 = arith.constant dense<0.000000e+00> : vector<1x8xf32>
    %28 = vector.multi_reduction <add>, %27, %cst_18 [2] : vector<1x8x8xf32> to vector<1x8xf32>
    %29 = vector.shape_cast %28 : vector<1x8xf32> to vector<1x8x1xf32>
    %30 = tpu.reciprocal %29 {approx = true} : vector<1x8x1xf32> -> vector<1x8x1xf32>
    %31 = vector.broadcast %30 : vector<1x8x1xf32> to vector<1x8x8xf32>
    %32 = arith.mulf %27, %31 : vector<1x8x8xf32>
    "tpu.trace_start"() <{level = 10 : i32, message = "bqk,bkh->bqh"}> : () -> ()
    %cst_19 = arith.constant dense<0.000000e+00> : vector<1x8x16xf32>
    %33 = tpu.matmul %32, %15, %cst_19 {dimension_numbers = #tpu.dot_dimension_numbers<[2], [1], [1], [2], [0, 0, 0, 1, 1, 2], [0], [0]>} : vector<1x8x8xf32>, vector<1x8x16xf32>, vector<1x8x16xf32> -> vector<1x8x16xf32>
    "tpu.trace_stop"() : () -> ()
    %c0_20 = arith.constant 0 : index
    %c0_21 = arith.constant 0 : index
    %c0_22 = arith.constant 0 : index
    %34 = vector.load %arg4[%c0_20, %c0_21, %c0_22] : memref<1x8x16xf32, #tpu.memory_space<vmem>>, vector<1x8x16xf32>
    tpu.vector_store %arg4[%c0_20, %c0_21, %c0_22], %33 {strides = array<i32>} : memref<1x8x16xf32, #tpu.memory_space<vmem>>, vector<1x8x16xf32>,
    return
  }
  func.func @transform_0(%arg0: i32) -> (i32, i32, i32) {
    %c0_i32 = arith.constant 0 : i32
    %c0_i32_0 = arith.constant 0 : i32
    %c0_i32_1 = arith.constant 0 : i32
    return %arg0, %c0_i32, %c0_i32_0 : i32, i32, i32
  }
  func.func @transform_1(%arg0: i32) -> (i32, i32, i32) {
    %c0_i32 = arith.constant 0 : i32
    %c0_i32_0 = arith.constant 0 : i32
    %c0_i32_1 = arith.constant 0 : i32
    %c0_i32_2 = arith.constant 0 : i32
    return %c0_i32, %c0_i32_0, %c0_i32_1 : i32, i32, i32
  }
  func.func @transform_2(%arg0: i32) -> (i32, i32) {
    %c0_i32 = arith.constant 0 : i32
    %c0_i32_0 = arith.constant 0 : i32
    %c0_i32_1 = arith.constant 0 : i32
    return %c0_i32, %c0_i32_0 : i32, i32
  }
  func.func @transform_3(%arg0: i32) -> (i32, i32, i32) {
    %c0_i32 = arith.constant 0 : i32
    %c0_i32_0 = arith.constant 0 : i32
    %c0_i32_1 = arith.constant 0 : i32
    return %arg0, %c0_i32, %c0_i32_0 : i32, i32, i32
  }
}

</mosaic_0001>

<llo_original>
// kernel: tpu_custom_call.1
$region0: #{tpu_custom_call.1}
  #allocation0 [shape = 'u32[]', space=smem, size = 0x4, offset = 0x4, fixed_abs, tag = 'smem constant byte address 0x4 - core index']
  #allocation1 [shape = 'u32[144,128]{1,0:T(1,128)}', space=vmem, size = 0x12000, scoped, tag = 'internal scratch']
  %s0 = inlined_call_operand.hbm [shape: f32[2,8,32], index: 0, kind: input, shape index: {}]
  %s1 = inlined_call_operand.hbm [shape: f32[32,48], index: 1, kind: input, shape index: {}]
  %s2 = inlined_call_operand.hbm [shape: f32[8,8], index: 2, kind: input, shape index: {}]
  %s3 = inlined_call_operand.hbm [shape: f32[2,8,16], index: 3, kind: output, shape index: {}]
  %s4 = sld [smem:[#allocation0]]
  $region57: #{tpu_custom_call.1} parent=0
    _
  %s6 = ssub.s32 1, %s4
  %s7 = scalar_select 0, %s6, %s4
  $region1: #{tpu_custom_call.1} parent=0
    #allocation2 [shape = 'u8[8192]{0}', space=vmem, size = 0x2000, scoped, tag = 'input window, operand 0']
    #allocation3 [shape = 's32[2]{0}', space=sflag, size = 0x8, scoped, tag = 'scoped memory for tpu_custom_call.1']
    #allocation4 [shape = 's32[2]{0}', space=sflag, size = 0x8, scoped, tag = 'scoped memory for tpu_custom_call.1']
    #allocation5 [shape = 'u8[16384]{0}', space=vmem, size = 0x4000, scoped, tag = 'input window, operand 1, single buffered']
    #allocation6 [shape = 's32[1]{0}', space=sflag, size = 0x4, scoped, tag = 'scoped memory for tpu_custom_call.1']
    #allocation7 [shape = 'u8[4096]{0}', space=vmem, size = 0x1000, scoped, tag = 'input window, operand 2, single buffered']
    #allocation8 [shape = 'u8[8192]{0}', space=vmem, size = 0x2000, scoped, tag = 'output window, operand 0']
    %8 = vsyncpa [#allocation3], 0
    %s9 = scalar_lea.sflag [#allocation3], 1
    %10 = vsyncpa %s9, 0
    %11 = vsyncpa [#allocation6], 0
    %12 = vsyncpa [#allocation4], 0
    %s13 = scalar_lea.sflag [#allocation4], 1
    %14 = vsyncpa %s13, 0
    loop: start=0, step=1, limit=4
    $region2: #{tpu_custom_call.1} parent=1 // loop_pre_header
      _
    $region3: #{tpu_custom_call.1} parent=1 // loop_header
      %s16 = sphi 0, %s20
      %p17 = scmp.ge.s32.totalorder %s16, 4
      %s26 = sphi 0, %s28
      %s29 = sphi 0, %s26
      %s30 = sphi 0, %s29
      %s46 = sphi 0, %s30
      %s50 = sphi 0, %s50
      %s52 = sphi 0, %s50
      %s53 = sphi 0, %s52
      %s67 = sphi 0, %s53
      %s71 = sphi 0, %s71
      %s73 = sphi 0, %s71
      %s74 = sphi 0, %s73
      %s88 = sphi 0, %s74
      %s94 = sphi 0, %s96
      %s97 = sphi 0, %s94
      %s98 = sphi 0, %s97
      %s114 = sphi 0, %s98
    $region4: #{tpu_custom_call.1} parent=1 // loop_header_branch
      %19 = sbr.rel (%p17) target = $region8
    $region5: #{tpu_custom_call.1} parent=1 // loop_body
      %s21 = ssub.s32 %s16, 1
      %s22 = ssub.s32 %s16, 2
      %s23 = sadd.s32 %s16, 1
      %s24 = ssub.s32 %s16, %s23
      %p25 = scmp.eq.s32.totalorder %s24, 0
      %s27 = sadd.s32 %s26, 1
      %s28 = scalar_select %p25, %s26, %s27
      %p31 = pneg %p25
      %p32 = scmp.eq.s32.totalorder %s16, 1
      %p33 = por %p31, %p32
      %p34 = scmp.ne.s32.totalorder %s26, %s29
      %p35 = scmp.eq.s32.totalorder %s16, 0
      %p36 = por %p34, %p35
      %p37 = scmp.ne.s32.totalorder %s26, %s29
      %p38 = scmp.eq.s32.totalorder %s21, 1
      %p39 = por %p37, %p38
      %p40 = scmp.ne.s32.totalorder %s29, %s30
      %p41 = scmp.eq.s32.totalorder %s21, 0
      %p42 = por %p40, %p41
      %p43 = scmp.ne.s32.totalorder %s29, %s30
      %p44 = scmp.eq.s32.totalorder %s22, 1
      %p45 = por %p43, %p44
      %p47 = scmp.ne.s32.totalorder %s30, %s46
      %p48 = scmp.eq.s32.totalorder %s22, 0
      %p49 = por %p47, %p48
      %s51 = sadd.s32 %s50, 1
      %p54 = scmp.eq.s32.totalorder %s16, 1
      %p55 = scmp.ne.s32.totalorder %s50, %s52
      %p56 = scmp.eq.s32.totalorder %s16, 0
      %p57 = por %p55, %p56
      %p58 = scmp.ne.s32.totalorder %s50, %s52
      %p59 = scmp.eq.s32.totalorder %s21, 1
      %p60 = por %p58, %p59
      %p61 = scmp.ne.s32.totalorder %s52, %s53
      %p62 = scmp.eq.s32.totalorder %s21, 0
      %p63 = por %p61, %p62
      %p64 = scmp.ne.s32.totalorder %s52, %s53
      %p65 = scmp.eq.s32.totalorder %s22, 1
      %p66 = por %p64, %p65
      %p68 = scmp.ne.s32.totalorder %s53, %s67
      %p69 = scmp.eq.s32.totalorder %s22, 0
      %p70 = por %p68, %p69
      %s72 = sadd.s32 %s71, 1
      %p75 = scmp.eq.s32.totalorder %s16, 1
      %p76 = scmp.ne.s32.totalorder %s71, %s73
      %p77 = scmp.eq.s32.totalorder %s16, 0
      %p78 = por %p76, %p77
      %p79 = scmp.ne.s32.totalorder %s71, %s73
      %p80 = scmp.eq.s32.totalorder %s21, 1
      %p81 = por %p79, %p80
      %p82 = scmp.ne.s32.totalorder %s73, %s74
      %p83 = scmp.eq.s32.totalorder %s21, 0
      %p84 = por %p82, %p83
      %p85 = scmp.ne.s32.totalorder %s73, %s74
      %p86 = scmp.eq.s32.totalorder %s22, 1
      %p87 = por %p85, %p86
      %p89 = scmp.ne.s32.totalorder %s74, %s88
      %p90 = scmp.eq.s32.totalorder %s22, 0
      %p91 = por %p89, %p90
      %s92 = ssub.s32 %s16, %s23
      %p93 = scmp.eq.s32.totalorder %s92, 0
      %s95 = sadd.s32 %s94, 1
      %s96 = scalar_select %p93, %s94, %s95
      %p99 = pneg %p93
      %p100 = scmp.eq.s32.totalorder %s16, 1
      %p101 = por %p99, %p100
      %p102 = scmp.ne.s32.totalorder %s94, %s97
      %p103 = scmp.eq.s32.totalorder %s16, 0
      %p104 = por %p102, %p103
      %p105 = scmp.ne.s32.totalorder %s94, %s97
      %p106 = scmp.eq.s32.totalorder %s21, 1
      %p107 = por %p105, %p106
      %p108 = scmp.ne.s32.totalorder %s97, %s98
      %p109 = scmp.eq.s32.totalorder %s21, 0
      %p110 = por %p108, %p109
      %p111 = scmp.ne.s32.totalorder %s97, %s98
      %p112 = scmp.eq.s32.totalorder %s22, 1
      %p113 = por %p111, %p112
      %p115 = scmp.ne.s32.totalorder %s98, %s114
      %p116 = scmp.eq.s32.totalorder %s22, 0
      %p117 = por %p115, %p116
      %p118 = scmp.le.s32.totalorder 1, %s16
      %p119 = scmp.lt.s32.totalorder %s16, 3
      %p120 = pnand %p118, %p119
      %p121 = pneg %p120
      // Predicated region
      $region9: #{tpu_custom_call.1} parent=5 // pred_check
        _
      $region10: #{tpu_custom_call.1} parent=5 // pred_check_branch
        %123 = sbr.rel (%p120) target = $region12
      $region11: #{tpu_custom_call.1} parent=5 // pred_region
        %s124 = ssub.s32 %s16, 1
        // Predicated region
        $region13: #{tpu_custom_call.1} parent=11 // pred_check
          %p125 = pneg %p63
        $region14: #{tpu_custom_call.1} parent=11 // pred_check_branch
          %127 = sbr.rel (%p125) target = $region16
        $region15: #{tpu_custom_call.1} parent=11 // pred_region
          %s129 = ssub.s32 512, 512
          %130 = vsyncadd [#allocation6], %s129
          %s131 = sshll.u32 [#allocation5], 4
          %s132 = int_to_ptr.vmem [resolvable:$true] %s131
          %137 = dma.hbm_to_vmem [thread:$0]  %s1, 512, %s132, [#allocation6], 128, 128, 8
        $region16: #{tpu_custom_call.1} parent=11 // pred_fallthru
          _
        // Predicated region
        $region17: #{tpu_custom_call.1} parent=11 // pred_check
          %p138 = pneg %p84
        $region18: #{tpu_custom_call.1} parent=11 // pred_check_branch
          %140 = sbr.rel (%p138) target = $region20
        $region19: #{tpu_custom_call.1} parent=11 // pred_region
          %s142 = ssub.s32 128, 128
          %143 = vsyncadd [#allocation6], %s142
          %s145 = sshll.u32 [#allocation7], 4
          %s146 = int_to_ptr.vmem [resolvable:$true] %s145
          %148 = dma.hbm_to_vmem [thread:$0]  %s2, 128, %s146, [#allocation6]
        $region20: #{tpu_custom_call.1} parent=11 // pred_fallthru
          _
      $region12: #{tpu_custom_call.1} parent=5 // pred_fallthru
        _
      %p149 = scmp.lt.s32.totalorder %s16, 2
      // Predicated region
      $region21: #{tpu_custom_call.1} parent=5 // pred_check
        %p150 = pneg %p149
      $region22: #{tpu_custom_call.1} parent=5 // pred_check_branch
        %152 = sbr.rel (%p150) target = $region24
      $region23: #{tpu_custom_call.1} parent=5 // pred_region
        // Predicated region
        $region25: #{tpu_custom_call.1} parent=23 // pred_check
          %p153 = pneg %p36
        $region26: #{tpu_custom_call.1} parent=23 // pred_check_branch
          %155 = sbr.rel (%p153) target = $region28
        $region27: #{tpu_custom_call.1} parent=23 // pred_region
          %s156 = sand.u32 %s26, 1
          %s157 = scalar_lea.sflag [#allocation3], %s156
          %s158 = sand.u32 %s26, 1
          %s159 = smul.addr %s158, 8
          %s160 = scalar_lea.vmem [#allocation2], %s159
          %s162 = ssub.s32 128, 128
          %163 = vsyncadd %s157, %s162
          %s164 = smul.addr %s16, 128
          %s165 = scalar_lea.hbm %s0, %s164
          %s167 = sshll.u32 %s160, 4
          %s168 = int_to_ptr.vmem [resolvable:$true] %s167
          %170 = dma.hbm_to_vmem [thread:$0]  %s165, 128, %s168, %s157
        $region28: #{tpu_custom_call.1} parent=23 // pred_fallthru
          _
      $region24: #{tpu_custom_call.1} parent=5 // pred_fallthru
        _
      %p171 = scmp.le.s32.totalorder 1, %s16
      %p172 = scmp.lt.s32.totalorder %s16, 3
      %p173 = pnand %p171, %p172
      %p174 = pneg %p173
      // Predicated region
      $region29: #{tpu_custom_call.1} parent=5 // pred_check
        _
      $region30: #{tpu_custom_call.1} parent=5 // pred_check_branch
        %176 = sbr.rel (%p173) target = $region32
      $region31: #{tpu_custom_call.1} parent=5 // pred_region
        %s177 = ssub.s32 %s16, 1
        %s178 = sand.u32 %s29, 1
        %s179 = scalar_lea.sflag [#allocation3], %s178
        %s180 = sand.u32 %s29, 1
        %s181 = smul.addr %s180, 8
        %s182 = scalar_lea.vmem [#allocation2], %s181
        // Predicated region
        $region33: #{tpu_custom_call.1} parent=31 // pred_check
          %p183 = pneg %p42
        $region34: #{tpu_custom_call.1} parent=31 // pred_check_branch
          %185 = sbr.rel (%p183) target = $region36
        $region35: #{tpu_custom_call.1} parent=31 // pred_region
          %186 = dma.done %s179, 128
        $region36: #{tpu_custom_call.1} parent=31 // pred_fallthru
          _
        // Predicated region
        $region37: #{tpu_custom_call.1} parent=31 // pred_check
          %p187 = pneg %p63
        $region38: #{tpu_custom_call.1} parent=31 // pred_check_branch
          %189 = sbr.rel (%p187) target = $region40
        $region39: #{tpu_custom_call.1} parent=31 // pred_region
          %190 = dma.done [#allocation6], 512
        $region40: #{tpu_custom_call.1} parent=31 // pred_fallthru
          _
        // Predicated region
        $region41: #{tpu_custom_call.1} parent=31 // pred_check
          %p191 = pneg %p84
        $region42: #{tpu_custom_call.1} parent=31 // pred_check_branch
          %193 = sbr.rel (%p191) target = $region44
        $region43: #{tpu_custom_call.1} parent=31 // pred_region
          %194 = dma.done [#allocation6], 128
        $region44: #{tpu_custom_call.1} parent=31 // pred_fallthru
          _
        %s195 = sand.u32 %s29, 1
        %s196 = scalar_lea.sflag [#allocation3], %s195
        %s197 = sand.u32 %s29, 1
        %s198 = smul.addr %s197, 8
        %s199 = scalar_lea.vmem [#allocation2], %s198
        %p200 = pneg %p42
        %p201 = pneg %p39
        %p202 = pneg %p63
        %p203 = pneg %p60
        %p204 = pneg %p84
        %p205 = pneg %p81
        %p206 = pneg %p110
        %p207 = pneg %p107
        %s208 = sand.u32 %s97, 1
        %s209 = scalar_lea.sflag [#allocation4], %s208
        %s210 = sand.u32 %s97, 1
        %s211 = smul.addr %s210, 8
        %s212 = scalar_lea.vmem [#allocation8], %s211
        %v213 = vld [vmem:[%s182] sm:$0xff]
        %v214 = vld [vmem:[#allocation5] sm:$0xff]
        %v215 = vld [vmem:[#allocation5 + $0x8] sm:$0xff]
        %v216 = vld [vmem:[#allocation5 + $0x10] sm:$0xff]
        %v217 = vld [vmem:[#allocation5 + $0x18] sm:$0xff]
        %vm218 = vcmask 261120
        %v220 = vsel %vm218, %v213, 0
        %222 = vmatprep.subr.mxu0 0.0
        %223 = vmatpush1.msra.mxu0 %v214
        %224 = vmatprep.subr.mxu0 0.0
        %225 = vmatpush1.msra.mxu0 %v215
        %226 = vmatprep.subr.mxu0 0.0
        %227 = vmatpush1.msra.mxu0 %v216
        %228 = vmatprep.subr.mxu0 0.0
        %229 = vmatpush1.msra.mxu0 %v217
        %230 = vmatprep.subr.mxu0 0.0
        %231 = vmatpush1.msra.mxu0 0.0
        %232 = vmatprep.subr.mxu0 0.0
        %233 = vmatpush1.msra.mxu0 0.0
        %234 = vmatprep.subr.mxu0 0.0
        %235 = vmatpush1.msra.mxu0 0.0
        %236 = vmatprep.subr.mxu0 0.0
        %237 = vmatpush1.msra.mxu0 0.0
        %238 = vmatprep.subr.mxu0 0.0
        %239 = vmatpush1.msra.mxu0 0.0
        %240 = vmatprep.subr.mxu0 0.0
        %241 = vmatpush1.msra.mxu0 0.0
        %242 = vmatprep.subr.mxu0 0.0
        %243 = vmatpush1.msra.mxu0 0.0
        %244 = vmatprep.subr.mxu0 0.0
        %245 = vmatpush1.msra.mxu0 0.0
        %246 = vmatprep.subr.mxu0 0.0
        %247 = vmatpush1.msra.mxu0 0.0
        %248 = vmatprep.subr.mxu0 0.0
        %249 = vmatpush1.msra.mxu0 0.0
        %250 = vmatprep.subr.mxu0 0.0
        %251 = vmatpush1.msra.mxu0 0.0
        %252 = vmatprep.subr.mxu0 0.0
        %253 = vmatpush1.msra.mxu0 0.0
        %254 = vmatprep.subr.mxu0 0.0
        %255 = vmatpush1.msra.mxu0 0.0
        %256 = vmatprep.subr.mxu0 0.0
        %257 = vmatpush1.msra.mxu0 0.0
        %258 = vmatprep.subr.mxu0 0.0
        %259 = vmatpush1.msra.mxu0 0.0
        %260 = vmatprep.subr.mxu0 0.0
        %261 = vmatpush1.msra.mxu0 0.0
        %262 = vmatprep.subr.mxu0 0.0
        %263 = vmatpush1.msra.mxu0 0.0
        %264 = vmatprep.subr.mxu0 0.0
        %265 = vmatpush1.msra.mxu0 0.0
        %266 = vmatprep.subr.mxu0 0.0
        %267 = vmatpush1.msra.mxu0 0.0
        %268 = vmatprep.subr.mxu0 0.0
        %269 = vmatpush1.msra.mxu0 0.0
        %270 = vmatprep.subr.mxu0 0.0
        %271 = vmatpush1.msra.mxu0 0.0
        %272 = vmatprep.subr.mxu0 0.0
        %273 = vmatpush1.msra.mxu0 0.0
        %274 = vmatprep.subr.mxu0 0.0
        %275 = vmatpush1.msra.mxu0 0.0
        %276 = vmatprep.subr.mxu0 0.0
        %277 = vmatpush1.msra.mxu0 0.0
        %278 = vmatprep.subr.mxu0 0.0
        %279 = vmatpush1.msra.mxu0 0.0
        %280 = vmatprep.subr.mxu0 0.0
        %281 = vmatpush1.msra.mxu0 0.0
        %282 = vmatprep.subr.mxu0 0.0
        %283 = vmatpush1.msra.mxu0 0.0
        %284 = vmatprep.subr.mxu0 0.0
        %285 = vmatpush1.msra.mxu0 0.0
        %286 = vmatprep.mubr.f32.mxu0 0.0
        %287 = vmatmul.mubr.f32.gmra.mrb[0].mxu0 %v220
        %v288 = vpop.f32.mrb[0].mxu0
        %v289 = vadd.f32 0.0, %v288
        %v290 = vpop.f32.mrb[0].mxu0
        %291 = vdwg.mxu0
        %v292 = vmul.f32 %v289, 0.17677669
        %294 = vrot.lane.b32.xlu0 %v292, 112
        %v295 = vpop.permute.xlu0 %294
        %vm296 = vcmask 130048
        %v297 = vsel %vm296, %v295, 0
        %v300 = vsel %vm296, %v289, 0
        %302 = vmatprep.subr.mxu0 0.0
        %303 = vmatpush1.xpose.msra.mxu0 %v300
        %304 = vmatprep.subr.mxu0 0.0
        %305 = vmatpush1.xpose.msra.mxu0 0.0
        %306 = vmatprep.subr.mxu0 0.0
        %307 = vmatpush1.xpose.msra.mxu0 0.0
        %308 = vmatprep.subr.mxu0 0.0
        %309 = vmatpush1.xpose.msra.mxu0 0.0
        %310 = vmatprep.subr.mxu0 0.0
        %311 = vmatpush1.xpose.msra.mxu0 0.0
        %312 = vmatprep.subr.mxu0 0.0
        %313 = vmatpush1.xpose.msra.mxu0 0.0
        %314 = vmatprep.subr.mxu0 0.0
        %315 = vmatpush1.xpose.msra.mxu0 0.0
        %316 = vmatprep.subr.mxu0 0.0
        %317 = vmatpush1.xpose.msra.mxu0 0.0
        %318 = vmatprep.subr.mxu0 0.0
        %319 = vmatpush1.xpose.msra.mxu0 0.0
        %320 = vmatprep.subr.mxu0 0.0
        %321 = vmatpush1.xpose.msra.mxu0 0.0
        %322 = vmatprep.subr.mxu0 0.0
        %323 = vmatpush1.xpose.msra.mxu0 0.0
        %324 = vmatprep.subr.mxu0 0.0
        %325 = vmatpush1.xpose.msra.mxu0 0.0
        %326 = vmatprep.subr.mxu0 0.0
        %327 = vmatpush1.xpose.msra.mxu0 0.0
        %328 = vmatprep.subr.mxu0 0.0
        %329 = vmatpush1.xpose.msra.mxu0 0.0
        %330 = vmatprep.subr.mxu0 0.0
        %331 = vmatpush1.xpose.msra.mxu0 0.0
        %332 = vmatprep.subr.mxu0 0.0
        %333 = vmatpush1.xpose.msra.mxu0 0.0
        %334 = vmatprep.subr.mxu0 0.0
        %335 = vmatpush1.xpose.msra.mxu0 0.0
        %336 = vmatprep.subr.mxu0 0.0
        %337 = vmatpush1.xpose.msra.mxu0 0.0
        %338 = vmatprep.subr.mxu0 0.0
        %339 = vmatpush1.xpose.msra.mxu0 0.0
        %340 = vmatprep.subr.mxu0 0.0
        %341 = vmatpush1.xpose.msra.mxu0 0.0
        %342 = vmatprep.subr.mxu0 0.0
        %343 = vmatpush1.xpose.msra.mxu0 0.0
        %344 = vmatprep.subr.mxu0 0.0
        %345 = vmatpush1.xpose.msra.mxu0 0.0
        %346 = vmatprep.subr.mxu0 0.0
        %347 = vmatpush1.xpose.msra.mxu0 0.0
        %348 = vmatprep.subr.mxu0 0.0
        %349 = vmatpush1.xpose.msra.mxu0 0.0
        %350 = vmatprep.subr.mxu0 0.0
        %351 = vmatpush1.xpose.msra.mxu0 0.0
        %352 = vmatprep.subr.mxu0 0.0
        %353 = vmatpush1.xpose.msra.mxu0 0.0
        %354 = vmatprep.subr.mxu0 0.0
        %355 = vmatpush1.xpose.msra.mxu0 0.0
        %356 = vmatprep.subr.mxu0 0.0
        %357 = vmatpush1.xpose.msra.mxu0 0.0
        %358 = vmatprep.subr.mxu0 0.0
        %359 = vmatpush1.xpose.msra.mxu0 0.0
        %360 = vmatprep.subr.mxu0 0.0
        %361 = vmatpush1.xpose.msra.mxu0 0.0
        %362 = vmatprep.subr.mxu0 0.0
        %363 = vmatpush1.xpose.msra.mxu0 0.0
        %364 = vmatprep.subr.mxu0 0.0
        %365 = vmatpush1.xpose.msra.mxu0 0.0
        %366 = vmatprep.mubr.f32.mxu0 0.0
        %367 = vmatmul.mubr.f32.gmra.mrb[0].mxu0 %v297
        %v368 = vpop.f32.mrb[0].mxu0
        %v369 = vadd.f32 0.0, %v368
        %v370 = vpop.f32.mrb[0].mxu0
        %371 = vdwg.mxu0
        %v372 = vld [vmem:[#allocation7] sm:$0xff]
        %vm373 = vcmp.ne.f32.partialorder %v372, 0.0
        %v374 = vsel %vm373, %v369, -inf
        %vm375 = vcmask 64512
        %v376 = vsel %vm375, %v374, -inf
        %377 = vmax.xlane.f32.xlu0 %v376
        %v378 = vpop.xlane.xlu0 %377
        %v379 = vsub.f32 %v374, %v378
        %v380 = vmul.f32 %v379, 1.442695
        %v381 = vpow.pop %v380
        %v382 = vsel %vm375, %v381, 0.0
        %383 = vadd.xlane.f32.xlu0 %v382
        %v384 = vpop.xlane.xlu0 %383
        %v385 = vrcp.pop %v384
        %v386 = vmul.f32 %v381, %v385
        %387 = vrot.lane.b32.xlu0 %v289, 96
        %v388 = vpop.permute.xlu0 %387
        %v391 = vsel %vm375, %v386, 0
        %393 = vmatprep.subr.mxu0 0.0
        %394 = vmatpush1.msra.mxu0 %v388
        %395 = vmatprep.subr.mxu0 0.0
        %396 = vmatpush1.msra.mxu0 0.0
        %397 = vmatprep.subr.mxu0 0.0
        %398 = vmatpush1.msra.mxu0 0.0
        %399 = vmatprep.subr.mxu0 0.0
        %400 = vmatpush1.msra.mxu0 0.0
        %401 = vmatprep.subr.mxu0 0.0
        %402 = vmatpush1.msra.mxu0 0.0
        %403 = vmatprep.subr.mxu0 0.0
        %404 = vmatpush1.msra.mxu0 0.0
        %405 = vmatprep.subr.mxu0 0.0
        %406 = vmatpush1.msra.mxu0 0.0
        %407 = vmatprep.subr.mxu0 0.0
        %408 = vmatpush1.msra.mxu0 0.0
        %409 = vmatprep.subr.mxu0 0.0
        %410 = vmatpush1.msra.mxu0 0.0
        %411 = vmatprep.subr.mxu0 0.0
        %412 = vmatpush1.msra.mxu0 0.0
        %413 = vmatprep.subr.mxu0 0.0
        %414 = vmatpush1.msra.mxu0 0.0
        %415 = vmatprep.subr.mxu0 0.0
        %416 = vmatpush1.msra.mxu0 0.0
        %417 = vmatprep.subr.mxu0 0.0
        %418 = vmatpush1.msra.mxu0 0.0
        %419 = vmatprep.subr.mxu0 0.0
        %420 = vmatpush1.msra.mxu0 0.0
        %421 = vmatprep.subr.mxu0 0.0
        %422 = vmatpush1.msra.mxu0 0.0
        %423 = vmatprep.subr.mxu0 0.0
        %424 = vmatpush1.msra.mxu0 0.0
        %425 = vmatprep.subr.mxu0 0.0
        %426 = vmatpush1.msra.mxu0 0.0
        %427 = vmatprep.subr.mxu0 0.0
        %428 = vmatpush1.msra.mxu0 0.0
        %429 = vmatprep.subr.mxu0 0.0
        %430 = vmatpush1.msra.mxu0 0.0
        %431 = vmatprep.subr.mxu0 0.0
        %432 = vmatpush1.msra.mxu0 0.0
        %433 = vmatprep.subr.mxu0 0.0
        %434 = vmatpush1.msra.mxu0 0.0
        %435 = vmatprep.subr.mxu0 0.0
        %436 = vmatpush1.msra.mxu0 0.0
        %437 = vmatprep.subr.mxu0 0.0
        %438 = vmatpush1.msra.mxu0 0.0
        %439 = vmatprep.subr.mxu0 0.0
        %440 = vmatpush1.msra.mxu0 0.0
        %441 = vmatprep.subr.mxu0 0.0
        %442 = vmatpush1.msra.mxu0 0.0
        %443 = vmatprep.subr.mxu0 0.0
        %444 = vmatpush1.msra.mxu0 0.0
        %445 = vmatprep.subr.mxu0 0.0
        %446 = vmatpush1.msra.mxu0 0.0
        %447 = vmatprep.subr.mxu0 0.0
        %448 = vmatpush1.msra.mxu0 0.0
        %449 = vmatprep.subr.mxu0 0.0
        %450 = vmatpush1.msra.mxu0 0.0
        %451 = vmatprep.subr.mxu0 0.0
        %452 = vmatpush1.msra.mxu0 0.0
        %453 = vmatprep.subr.mxu0 0.0
        %454 = vmatpush1.msra.mxu0 0.0
        %455 = vmatprep.subr.mxu0 0.0
        %456 = vmatpush1.msra.mxu0 0.0
        %457 = vmatprep.mubr.f32.mxu0 0.0
        %458 = vmatmul.mubr.f32.gmra.mrb[0].mxu0 %v391
        %v459 = vpop.f32.mrb[0].mxu0
        %v460 = vadd.f32 0.0, %v459
        %v461 = vpop.f32.mrb[0].mxu0
        %462 = vdwg.mxu0
        %463 = vst.msk [vmem:[%s212] sm:$0xff] %vm296, %v460
        %s464 = sand.u32 %s97, 1
        %s465 = scalar_lea.sflag [#allocation4], %s464
        %s466 = sand.u32 %s97, 1
        %s467 = smul.addr %s466, 8
        %s468 = scalar_lea.vmem [#allocation8], %s467
        // Predicated region
        $region45: #{tpu_custom_call.1} parent=31 // pred_check
          %p469 = pneg %p107
        $region46: #{tpu_custom_call.1} parent=31 // pred_check_branch
          %471 = sbr.rel (%p469) target = $region48
        $region47: #{tpu_custom_call.1} parent=31 // pred_region
          %s473 = ssub.s32 128, 128
          %474 = vsyncadd %s465, %s473
          %s475 = smul.addr %s21, 128
          %s476 = scalar_lea.hbm %s3, %s475
          %s478 = sshll.u32 %s468, 4
          %s479 = int_to_ptr.vmem [resolvable:$true] %s478
          %481 = dma.vmem_to_hbm [thread:$0]  %s479, 128, %s476, %s465
        $region48: #{tpu_custom_call.1} parent=31 // pred_fallthru
          _
      $region32: #{tpu_custom_call.1} parent=5 // pred_fallthru
        _
      %p482 = scmp.le.s32.totalorder 2, %s16
      // Predicated region
      $region49: #{tpu_custom_call.1} parent=5 // pred_check
        %p483 = pneg %p482
      $region50: #{tpu_custom_call.1} parent=5 // pred_check_branch
        %485 = sbr.rel (%p483) target = $region52
      $region51: #{tpu_custom_call.1} parent=5 // pred_region
        %s486 = ssub.s32 %s16, 2
        // Predicated region
        $region53: #{tpu_custom_call.1} parent=51 // pred_check
          %p487 = pneg %p113
        $region54: #{tpu_custom_call.1} parent=51 // pred_check_branch
          %489 = sbr.rel (%p487) target = $region56
        $region55: #{tpu_custom_call.1} parent=51 // pred_region
          %s490 = sand.u32 %s98, 1
          %s491 = scalar_lea.sflag [#allocation4], %s490
          %s492 = sand.u32 %s98, 1
          %s493 = smul.addr %s492, 8
          %s494 = scalar_lea.vmem [#allocation8], %s493
          %495 = dma.done %s491, 128
        $region56: #{tpu_custom_call.1} parent=51 // pred_fallthru
          _
      $region52: #{tpu_custom_call.1} parent=5 // pred_fallthru
        _
    $region6: #{tpu_custom_call.1} parent=1 // loop_footer
      %s20 = sadd.s32 1, %s16
    $region7: #{tpu_custom_call.1} parent=1 // loop_footer_branch
      %15 = sbr.rel target = $region3
    $region8: #{tpu_custom_call.1} parent=1 // loop_exit
      _
    %496 = vsyncpa [#allocation3], 1
    %s497 = scalar_lea.sflag [#allocation3], 1
    %498 = vsyncpa %s497, 1
    %499 = vsyncpa [#allocation6], 1
    %500 = vsyncpa [#allocation4], 1
    %s501 = scalar_lea.sflag [#allocation4], 1
    %502 = vsyncpa %s501, 1

// kernel: tpu_custom_call.1
$region0: #{tpu_custom_call.1}
  #allocation0 [shape = 'u32[]', space=smem, size = 0x4, offset = 0x4, fixed_abs, tag = 'smem constant byte address 0x4 - core index']
  #allocation1 [shape = 'u32[144,128]{1,0:T(1,128)}', space=vmem, size = 0x12000, scoped, tag = 'internal scratch']
  %s0 = inlined_call_operand.vmem [shape: f32[2,8,32], index: 0, kind: input, shape index: {}]
  %s1 = inlined_call_operand.vmem [shape: f32[3,32,16], index: 1, kind: input, shape index: {}]
  %s2 = inlined_call_operand.vmem [shape: f32[8,8], index: 2, kind: input, shape index: {}]
  %s3 = inlined_call_operand.hbm [shape: f32[2,8,16], index: 3, kind: output, shape index: {}]
  %s4 = sld [smem:[#allocation0]]
  $region45: #{tpu_custom_call.1} parent=0
    _
  %s6 = ssub.s32 1, %s4
  %s7 = scalar_select 0, %s6, %s4
  $region1: #{tpu_custom_call.1} parent=0
    #allocation2 [shape = 'u8[8192]{0}', space=vmem, size = 0x2000, scoped, tag = 'output window, operand 0']
    #allocation3 [shape = 's32[2]{0}', space=sflag, size = 0x8, scoped, tag = 'scoped memory for tpu_custom_call.1']
    %8 = vsyncpa [#allocation3], 0
    %s9 = scalar_lea.sflag [#allocation3], 1
    %10 = vsyncpa %s9, 0
    loop: start=0, step=1, limit=4
    $region2: #{tpu_custom_call.1} parent=1 // loop_pre_header
      _
    $region3: #{tpu_custom_call.1} parent=1 // loop_header
      %s12 = sphi 0, %s16
      %p13 = scmp.ge.s32.totalorder %s12, 4
      %s22 = sphi 0, %s24
      %s25 = sphi 0, %s22
      %s26 = sphi 0, %s25
      %s42 = sphi 0, %s26
      %s46 = sphi 0, %s46
      %s48 = sphi 0, %s46
      %s49 = sphi 0, %s48
      %s63 = sphi 0, %s49
      %s67 = sphi 0, %s67
      %s69 = sphi 0, %s67
      %s70 = sphi 0, %s69
      %s84 = sphi 0, %s70
      %s90 = sphi 0, %s92
      %s93 = sphi 0, %s90
      %s94 = sphi 0, %s93
      %s110 = sphi 0, %s94
    $region4: #{tpu_custom_call.1} parent=1 // loop_header_branch
      %15 = sbr.rel (%p13) target = $region8
    $region5: #{tpu_custom_call.1} parent=1 // loop_body
      %s17 = ssub.s32 %s12, 1
      %s18 = ssub.s32 %s12, 2
      %s19 = sadd.s32 %s12, 1
      %s20 = ssub.s32 %s12, %s19
      %p21 = scmp.eq.s32.totalorder %s20, 0
      %s23 = sadd.s32 %s22, 1
      %s24 = scalar_select %p21, %s22, %s23
      %p27 = pneg %p21
      %p28 = scmp.eq.s32.totalorder %s12, 1
      %p29 = por %p27, %p28
      %p30 = scmp.ne.s32.totalorder %s22, %s25
      %p31 = scmp.eq.s32.totalorder %s12, 0
      %p32 = por %p30, %p31
      %p33 = scmp.ne.s32.totalorder %s22, %s25
      %p34 = scmp.eq.s32.totalorder %s17, 1
      %p35 = por %p33, %p34
      %p36 = scmp.ne.s32.totalorder %s25, %s26
      %p37 = scmp.eq.s32.totalorder %s17, 0
      %p38 = por %p36, %p37
      %p39 = scmp.ne.s32.totalorder %s25, %s26
      %p40 = scmp.eq.s32.totalorder %s18, 1
      %p41 = por %p39, %p40
      %p43 = scmp.ne.s32.totalorder %s26, %s42
      %p44 = scmp.eq.s32.totalorder %s18, 0
      %p45 = por %p43, %p44
      %s47 = sadd.s32 %s46, 1
      %p50 = scmp.eq.s32.totalorder %s12, 1
      %p51 = scmp.ne.s32.totalorder %s46, %s48
      %p52 = scmp.eq.s32.totalorder %s12, 0
      %p53 = por %p51, %p52
      %p54 = scmp.ne.s32.totalorder %s46, %s48
      %p55 = scmp.eq.s32.totalorder %s17, 1
      %p56 = por %p54, %p55
      %p57 = scmp.ne.s32.totalorder %s48, %s49
      %p58 = scmp.eq.s32.totalorder %s17, 0
      %p59 = por %p57, %p58
      %p60 = scmp.ne.s32.totalorder %s48, %s49
      %p61 = scmp.eq.s32.totalorder %s18, 1
      %p62 = por %p60, %p61
      %p64 = scmp.ne.s32.totalorder %s49, %s63
      %p65 = scmp.eq.s32.totalorder %s18, 0
      %p66 = por %p64, %p65
      %s68 = sadd.s32 %s67, 1
      %p71 = scmp.eq.s32.totalorder %s12, 1
      %p72 = scmp.ne.s32.totalorder %s67, %s69
      %p73 = scmp.eq.s32.totalorder %s12, 0
      %p74 = por %p72, %p73
      %p75 = scmp.ne.s32.totalorder %s67, %s69
      %p76 = scmp.eq.s32.totalorder %s17, 1
      %p77 = por %p75, %p76
      %p78 = scmp.ne.s32.totalorder %s69, %s70
      %p79 = scmp.eq.s32.totalorder %s17, 0
      %p80 = por %p78, %p79
      %p81 = scmp.ne.s32.totalorder %s69, %s70
      %p82 = scmp.eq.s32.totalorder %s18, 1
      %p83 = por %p81, %p82
      %p85 = scmp.ne.s32.totalorder %s70, %s84
      %p86 = scmp.eq.s32.totalorder %s18, 0
      %p87 = por %p85, %p86
      %s88 = ssub.s32 %s12, %s19
      %p89 = scmp.eq.s32.totalorder %s88, 0
      %s91 = sadd.s32 %s90, 1
      %s92 = scalar_select %p89, %s90, %s91
      %p95 = pneg %p89
      %p96 = scmp.eq.s32.totalorder %s12, 1
      %p97 = por %p95, %p96
      %p98 = scmp.ne.s32.totalorder %s90, %s93
      %p99 = scmp.eq.s32.totalorder %s12, 0
      %p100 = por %p98, %p99
      %p101 = scmp.ne.s32.totalorder %s90, %s93
      %p102 = scmp.eq.s32.totalorder %s17, 1
      %p103 = por %p101, %p102
      %p104 = scmp.ne.s32.totalorder %s93, %s94
      %p105 = scmp.eq.s32.totalorder %s17, 0
      %p106 = por %p104, %p105
      %p107 = scmp.ne.s32.totalorder %s93, %s94
      %p108 = scmp.eq.s32.totalorder %s18, 1
      %p109 = por %p107, %p108
      %p111 = scmp.ne.s32.totalorder %s94, %s110
      %p112 = scmp.eq.s32.totalorder %s18, 0
      %p113 = por %p111, %p112
      %p114 = scmp.le.s32.totalorder 1, %s12
      %p115 = scmp.lt.s32.totalorder %s12, 3
      %p116 = pnand %p114, %p115
      %p117 = pneg %p116
      // Predicated region
      $region9: #{tpu_custom_call.1} parent=5 // pred_check
        _
      $region10: #{tpu_custom_call.1} parent=5 // pred_check_branch
        %119 = sbr.rel (%p116) target = $region12
      $region11: #{tpu_custom_call.1} parent=5 // pred_region
        %s120 = ssub.s32 %s12, 1
        // Predicated region
        $region13: #{tpu_custom_call.1} parent=11 // pred_check
          %p121 = pneg %p59
        $region14: #{tpu_custom_call.1} parent=11 // pred_check_branch
          %123 = sbr.rel (%p121) target = $region16
        $region15: #{tpu_custom_call.1} parent=11 // pred_region
          _
        $region16: #{tpu_custom_call.1} parent=11 // pred_fallthru
          _
        // Predicated region
        $region17: #{tpu_custom_call.1} parent=11 // pred_check
          %p124 = pneg %p80
        $region18: #{tpu_custom_call.1} parent=11 // pred_check_branch
          %126 = sbr.rel (%p124) target = $region20
        $region19: #{tpu_custom_call.1} parent=11 // pred_region
          _
        $region20: #{tpu_custom_call.1} parent=11 // pred_fallthru
          _
      $region12: #{tpu_custom_call.1} parent=5 // pred_fallthru
        _
      %p127 = scmp.lt.s32.totalorder %s12, 2
      // Predicated region
      $region21: #{tpu_custom_call.1} parent=5 // pred_check
        %p128 = pneg %p127
      $region22: #{tpu_custom_call.1} parent=5 // pred_check_branch
        %130 = sbr.rel (%p128) target = $region24
      $region23: #{tpu_custom_call.1} parent=5 // pred_region
        // Predicated region
        $region25: #{tpu_custom_call.1} parent=23 // pred_check
          %p131 = pneg %p32
        $region26: #{tpu_custom_call.1} parent=23 // pred_check_branch
          %133 = sbr.rel (%p131) target = $region28
        $region27: #{tpu_custom_call.1} parent=23 // pred_region
          %p134 = scmp.lt.s32.totalorder %s12, 1
          %s135 = scalar_select %p134, %s12, 1
          %s136 = smul.addr %s135, 8
          %s137 = scalar_lea.vmem %s0, %s136
        $region28: #{tpu_custom_call.1} parent=23 // pred_fallthru
          _
      $region24: #{tpu_custom_call.1} parent=5 // pred_fallthru
        _
      %p138 = scmp.le.s32.totalorder 1, %s12
      %p139 = scmp.lt.s32.totalorder %s12, 3
      %p140 = pnand %p138, %p139
      %p141 = pneg %p140
      // Predicated region
      $region29: #{tpu_custom_call.1} parent=5 // pred_check
        _
      $region30: #{tpu_custom_call.1} parent=5 // pred_check_branch
        %143 = sbr.rel (%p140) target = $region32
      $region31: #{tpu_custom_call.1} parent=5 // pred_region
        %s144 = ssub.s32 %s12, 1
        %p145 = scmp.lt.s32.totalorder %s17, 1
        %s146 = scalar_select %p145, %s17, 1
        %s147 = smul.addr %s146, 8
        %s148 = scalar_lea.vmem %s0, %s147
        %p149 = pneg %p38
        %p150 = pneg %p35
        %p151 = pneg %p59
        %p152 = pneg %p56
        %p153 = pneg %p80
        %p154 = pneg %p77
        %p155 = pneg %p106
        %p156 = pneg %p103
        %s157 = sand.u32 %s93, 1
        %s158 = scalar_lea.sflag [#allocation3], %s157
        %s159 = sand.u32 %s93, 1
        %s160 = smul.addr %s159, 8
        %s161 = scalar_lea.vmem [#allocation2], %s160
        %p162 = scmp.lt.s32.totalorder %s17, 1
        %s163 = scalar_select %p162, %s17, 1
        %s164 = smul.addr %s163, 8
        %s165 = scalar_lea.vmem %s0, %s164
        %v166 = vld [vmem:[%s165] sm:$0xff]
        %v167 = vld [vmem:[%s1] sm:$0xff]
        %v168 = vld [vmem:[%s1 + $0x8] sm:$0xff]
        %v169 = vld [vmem:[%s1 + $0x10] sm:$0xff]
        %v170 = vld [vmem:[%s1 + $0x18] sm:$0xff]
        %s171 = scalar_lea.vmem %s1, 32
        %v172 = vld [vmem:[%s171] sm:$0xff]
        %v173 = vld [vmem:[%s171 + $0x8] sm:$0xff]
        %v174 = vld [vmem:[%s171 + $0x10] sm:$0xff]
        %v175 = vld [vmem:[%s171 + $0x18] sm:$0xff]
        %s176 = scalar_lea.vmem %s1, 64
        %v177 = vld [vmem:[%s176] sm:$0xff]
        %v178 = vld [vmem:[%s176 + $0x8] sm:$0xff]
        %v179 = vld [vmem:[%s176 + $0x10] sm:$0xff]
        %v180 = vld [vmem:[%s176 + $0x18] sm:$0xff]
        %vm181 = vcmask 261120
        %v183 = vsel %vm181, %v166, 0
        %185 = vmatprep.subr.mxu0 0.0
        %186 = vmatpush1.msra.mxu0 %v167
        %187 = vmatprep.subr.mxu0 0.0
        %188 = vmatpush1.msra.mxu0 %v168
        %189 = vmatprep.subr.mxu0 0.0
        %190 = vmatpush1.msra.mxu0 %v169
        %191 = vmatprep.subr.mxu0 0.0
        %192 = vmatpush1.msra.mxu0 %v170
        %193 = vmatprep.subr.mxu0 0.0
        %194 = vmatpush1.msra.mxu0 0.0
        %195 = vmatprep.subr.mxu0 0.0
        %196 = vmatpush1.msra.mxu0 0.0
        %197 = vmatprep.subr.mxu0 0.0
        %198 = vmatpush1.msra.mxu0 0.0
        %199 = vmatprep.subr.mxu0 0.0
        %200 = vmatpush1.msra.mxu0 0.0
        %201 = vmatprep.subr.mxu0 0.0
        %202 = vmatpush1.msra.mxu0 0.0
        %203 = vmatprep.subr.mxu0 0.0
        %204 = vmatpush1.msra.mxu0 0.0
        %205 = vmatprep.subr.mxu0 0.0
        %206 = vmatpush1.msra.mxu0 0.0
        %207 = vmatprep.subr.mxu0 0.0
        %208 = vmatpush1.msra.mxu0 0.0
        %209 = vmatprep.subr.mxu0 0.0
        %210 = vmatpush1.msra.mxu0 0.0
        %211 = vmatprep.subr.mxu0 0.0
        %212 = vmatpush1.msra.mxu0 0.0
        %213 = vmatprep.subr.mxu0 0.0
        %214 = vmatpush1.msra.mxu0 0.0
        %215 = vmatprep.subr.mxu0 0.0
        %216 = vmatpush1.msra.mxu0 0.0
        %217 = vmatprep.subr.mxu0 0.0
        %218 = vmatpush1.msra.mxu0 0.0
        %219 = vmatprep.subr.mxu0 0.0
        %220 = vmatpush1.msra.mxu0 0.0
        %221 = vmatprep.subr.mxu0 0.0
        %222 = vmatpush1.msra.mxu0 0.0
        %223 = vmatprep.subr.mxu0 0.0
        %224 = vmatpush1.msra.mxu0 0.0
        %225 = vmatprep.subr.mxu0 0.0
        %226 = vmatpush1.msra.mxu0 0.0
        %227 = vmatprep.subr.mxu0 0.0
        %228 = vmatpush1.msra.mxu0 0.0
        %229 = vmatprep.subr.mxu0 0.0
        %230 = vmatpush1.msra.mxu0 0.0
        %231 = vmatprep.subr.mxu0 0.0
        %232 = vmatpush1.msra.mxu0 0.0
        %233 = vmatprep.subr.mxu0 0.0
        %234 = vmatpush1.msra.mxu0 0.0
        %235 = vmatprep.subr.mxu0 0.0
        %236 = vmatpush1.msra.mxu0 0.0
        %237 = vmatprep.subr.mxu0 0.0
        %238 = vmatpush1.msra.mxu0 0.0
        %239 = vmatprep.subr.mxu0 0.0
        %240 = vmatpush1.msra.mxu0 0.0
        %241 = vmatprep.subr.mxu0 0.0
        %242 = vmatpush1.msra.mxu0 0.0
        %243 = vmatprep.subr.mxu0 0.0
        %244 = vmatpush1.msra.mxu0 0.0
        %245 = vmatprep.subr.mxu0 0.0
        %246 = vmatpush1.msra.mxu0 0.0
        %247 = vmatprep.subr.mxu0 0.0
        %248 = vmatpush1.msra.mxu0 0.0
        %249 = vmatprep.mubr.f32.mxu0 0.0
        %250 = vmatmul.mubr.f32.gmra.mrb[0].mxu0 %v183
        %v251 = vpop.f32.mrb[0].mxu0
        %v252 = vadd.f32 0.0, %v251
        %v253 = vpop.f32.mrb[0].mxu0
        %254 = vdwg.mxu0
        %255 = vmatprep.subr.mxu0 0.0
        %256 = vmatpush1.msra.mxu0 %v172
        %257 = vmatprep.subr.mxu0 0.0
        %258 = vmatpush1.msra.mxu0 %v173
        %259 = vmatprep.subr.mxu0 0.0
        %260 = vmatpush1.msra.mxu0 %v174
        %261 = vmatprep.subr.mxu0 0.0
        %262 = vmatpush1.msra.mxu0 %v175
        %263 = vmatprep.subr.mxu0 0.0
        %264 = vmatpush1.msra.mxu0 0.0
        %265 = vmatprep.subr.mxu0 0.0
        %266 = vmatpush1.msra.mxu0 0.0
        %267 = vmatprep.subr.mxu0 0.0
        %268 = vmatpush1.msra.mxu0 0.0
        %269 = vmatprep.subr.mxu0 0.0
        %270 = vmatpush1.msra.mxu0 0.0
        %271 = vmatprep.subr.mxu0 0.0
        %272 = vmatpush1.msra.mxu0 0.0
        %273 = vmatprep.subr.mxu0 0.0
        %274 = vmatpush1.msra.mxu0 0.0
        %275 = vmatprep.subr.mxu0 0.0
        %276 = vmatpush1.msra.mxu0 0.0
        %277 = vmatprep.subr.mxu0 0.0
        %278 = vmatpush1.msra.mxu0 0.0
        %279 = vmatprep.subr.mxu0 0.0
        %280 = vmatpush1.msra.mxu0 0.0
        %281 = vmatprep.subr.mxu0 0.0
        %282 = vmatpush1.msra.mxu0 0.0
        %283 = vmatprep.subr.mxu0 0.0
        %284 = vmatpush1.msra.mxu0 0.0
        %285 = vmatprep.subr.mxu0 0.0
        %286 = vmatpush1.msra.mxu0 0.0
        %287 = vmatprep.subr.mxu0 0.0
        %288 = vmatpush1.msra.mxu0 0.0
        %289 = vmatprep.subr.mxu0 0.0
        %290 = vmatpush1.msra.mxu0 0.0
        %291 = vmatprep.subr.mxu0 0.0
        %292 = vmatpush1.msra.mxu0 0.0
        %293 = vmatprep.subr.mxu0 0.0
        %294 = vmatpush1.msra.mxu0 0.0
        %295 = vmatprep.subr.mxu0 0.0
        %296 = vmatpush1.msra.mxu0 0.0
        %297 = vmatprep.subr.mxu0 0.0
        %298 = vmatpush1.msra.mxu0 0.0
        %299 = vmatprep.subr.mxu0 0.0
        %300 = vmatpush1.msra.mxu0 0.0
        %301 = vmatprep.subr.mxu0 0.0
        %302 = vmatpush1.msra.mxu0 0.0
        %303 = vmatprep.subr.mxu0 0.0
        %304 = vmatpush1.msra.mxu0 0.0
        %305 = vmatprep.subr.mxu0 0.0
        %306 = vmatpush1.msra.mxu0 0.0
        %307 = vmatprep.subr.mxu0 0.0
        %308 = vmatpush1.msra.mxu0 0.0
        %309 = vmatprep.subr.mxu0 0.0
        %310 = vmatpush1.msra.mxu0 0.0
        %311 = vmatprep.subr.mxu0 0.0
        %312 = vmatpush1.msra.mxu0 0.0
        %313 = vmatprep.subr.mxu0 0.0
        %314 = vmatpush1.msra.mxu0 0.0
        %315 = vmatprep.subr.mxu0 0.0
        %316 = vmatpush1.msra.mxu0 0.0
        %317 = vmatprep.subr.mxu0 0.0
        %318 = vmatpush1.msra.mxu0 0.0
        %319 = vmatprep.mubr.f32.mxu0 0.0
        %320 = vmatmul.mubr.f32.gmra.mrb[0].mxu0 %v183
        %v321 = vpop.f32.mrb[0].mxu0
        %v322 = vadd.f32 0.0, %v321
        %v323 = vpop.f32.mrb[0].mxu0
        %324 = vdwg.mxu0
        %v325 = vmul.f32 %v322, 0.17677669
        %326 = vmatprep.subr.mxu0 0.0
        %327 = vmatpush1.msra.mxu0 %v177
        %328 = vmatprep.subr.mxu0 0.0
        %329 = vmatpush1.msra.mxu0 %v178
        %330 = vmatprep.subr.mxu0 0.0
        %331 = vmatpush1.msra.mxu0 %v179
        %332 = vmatprep.subr.mxu0 0.0
        %333 = vmatpush1.msra.mxu0 %v180
        %334 = vmatprep.subr.mxu0 0.0
        %335 = vmatpush1.msra.mxu0 0.0
        %336 = vmatprep.subr.mxu0 0.0
        %337 = vmatpush1.msra.mxu0 0.0
        %338 = vmatprep.subr.mxu0 0.0
        %339 = vmatpush1.msra.mxu0 0.0
        %340 = vmatprep.subr.mxu0 0.0
        %341 = vmatpush1.msra.mxu0 0.0
        %342 = vmatprep.subr.mxu0 0.0
        %343 = vmatpush1.msra.mxu0 0.0
        %344 = vmatprep.subr.mxu0 0.0
        %345 = vmatpush1.msra.mxu0 0.0
        %346 = vmatprep.subr.mxu0 0.0
        %347 = vmatpush1.msra.mxu0 0.0
        %348 = vmatprep.subr.mxu0 0.0
        %349 = vmatpush1.msra.mxu0 0.0
        %350 = vmatprep.subr.mxu0 0.0
        %351 = vmatpush1.msra.mxu0 0.0
        %352 = vmatprep.subr.mxu0 0.0
        %353 = vmatpush1.msra.mxu0 0.0
        %354 = vmatprep.subr.mxu0 0.0
        %355 = vmatpush1.msra.mxu0 0.0
        %356 = vmatprep.subr.mxu0 0.0
        %357 = vmatpush1.msra.mxu0 0.0
        %358 = vmatprep.subr.mxu0 0.0
        %359 = vmatpush1.msra.mxu0 0.0
        %360 = vmatprep.subr.mxu0 0.0
        %361 = vmatpush1.msra.mxu0 0.0
        %362 = vmatprep.subr.mxu0 0.0
        %363 = vmatpush1.msra.mxu0 0.0
        %364 = vmatprep.subr.mxu0 0.0
        %365 = vmatpush1.msra.mxu0 0.0
        %366 = vmatprep.subr.mxu0 0.0
        %367 = vmatpush1.msra.mxu0 0.0
        %368 = vmatprep.subr.mxu0 0.0
        %369 = vmatpush1.msra.mxu0 0.0
        %370 = vmatprep.subr.mxu0 0.0
        %371 = vmatpush1.msra.mxu0 0.0
        %372 = vmatprep.subr.mxu0 0.0
        %373 = vmatpush1.msra.mxu0 0.0
        %374 = vmatprep.subr.mxu0 0.0
        %375 = vmatpush1.msra.mxu0 0.0
        %376 = vmatprep.subr.mxu0 0.0
        %377 = vmatpush1.msra.mxu0 0.0
        %378 = vmatprep.subr.mxu0 0.0
        %379 = vmatpush1.msra.mxu0 0.0
        %380 = vmatprep.subr.mxu0 0.0
        %381 = vmatpush1.msra.mxu0 0.0
        %382 = vmatprep.subr.mxu0 0.0
        %383 = vmatpush1.msra.mxu0 0.0
        %384 = vmatprep.subr.mxu0 0.0
        %385 = vmatpush1.msra.mxu0 0.0
        %386 = vmatprep.subr.mxu0 0.0
        %387 = vmatpush1.msra.mxu0 0.0
        %388 = vmatprep.subr.mxu0 0.0
        %389 = vmatpush1.msra.mxu0 0.0
        %390 = vmatprep.mubr.f32.mxu0 0.0
        %391 = vmatmul.mubr.f32.gmra.mrb[0].mxu0 %v183
        %v392 = vpop.f32.mrb[0].mxu0
        %v393 = vadd.f32 0.0, %v392
        %v394 = vpop.f32.mrb[0].mxu0
        %395 = vdwg.mxu0
        %vm396 = vcmask 130048
        %v398 = vsel %vm396, %v325, 0
        %v401 = vsel %vm396, %v252, 0
        %403 = vmatprep.subr.mxu0 0.0
        %404 = vmatpush1.xpose.msra.mxu0 %v401
        %405 = vmatprep.subr.mxu0 0.0
        %406 = vmatpush1.xpose.msra.mxu0 0.0
        %407 = vmatprep.subr.mxu0 0.0
        %408 = vmatpush1.xpose.msra.mxu0 0.0
        %409 = vmatprep.subr.mxu0 0.0
        %410 = vmatpush1.xpose.msra.mxu0 0.0
        %411 = vmatprep.subr.mxu0 0.0
        %412 = vmatpush1.xpose.msra.mxu0 0.0
        %413 = vmatprep.subr.mxu0 0.0
        %414 = vmatpush1.xpose.msra.mxu0 0.0
        %415 = vmatprep.subr.mxu0 0.0
        %416 = vmatpush1.xpose.msra.mxu0 0.0
        %417 = vmatprep.subr.mxu0 0.0
        %418 = vmatpush1.xpose.msra.mxu0 0.0
        %419 = vmatprep.subr.mxu0 0.0
        %420 = vmatpush1.xpose.msra.mxu0 0.0
        %421 = vmatprep.subr.mxu0 0.0
        %422 = vmatpush1.xpose.msra.mxu0 0.0
        %423 = vmatprep.subr.mxu0 0.0
        %424 = vmatpush1.xpose.msra.mxu0 0.0
        %425 = vmatprep.subr.mxu0 0.0
        %426 = vmatpush1.xpose.msra.mxu0 0.0
        %427 = vmatprep.subr.mxu0 0.0
        %428 = vmatpush1.xpose.msra.mxu0 0.0
        %429 = vmatprep.subr.mxu0 0.0
        %430 = vmatpush1.xpose.msra.mxu0 0.0
        %431 = vmatprep.subr.mxu0 0.0
        %432 = vmatpush1.xpose.msra.mxu0 0.0
        %433 = vmatprep.subr.mxu0 0.0
        %434 = vmatpush1.xpose.msra.mxu0 0.0
        %435 = vmatprep.subr.mxu0 0.0
        %436 = vmatpush1.xpose.msra.mxu0 0.0
        %437 = vmatprep.subr.mxu0 0.0
        %438 = vmatpush1.xpose.msra.mxu0 0.0
        %439 = vmatprep.subr.mxu0 0.0
        %440 = vmatpush1.xpose.msra.mxu0 0.0
        %441 = vmatprep.subr.mxu0 0.0
        %442 = vmatpush1.xpose.msra.mxu0 0.0
        %443 = vmatprep.subr.mxu0 0.0
        %444 = vmatpush1.xpose.msra.mxu0 0.0
        %445 = vmatprep.subr.mxu0 0.0
        %446 = vmatpush1.xpose.msra.mxu0 0.0
        %447 = vmatprep.subr.mxu0 0.0
        %448 = vmatpush1.xpose.msra.mxu0 0.0
        %449 = vmatprep.subr.mxu0 0.0
        %450 = vmatpush1.xpose.msra.mxu0 0.0
        %451 = vmatprep.subr.mxu0 0.0
        %452 = vmatpush1.xpose.msra.mxu0 0.0
        %453 = vmatprep.subr.mxu0 0.0
        %454 = vmatpush1.xpose.msra.mxu0 0.0
        %455 = vmatprep.subr.mxu0 0.0
        %456 = vmatpush1.xpose.msra.mxu0 0.0
        %457 = vmatprep.subr.mxu0 0.0
        %458 = vmatpush1.xpose.msra.mxu0 0.0
        %459 = vmatprep.subr.mxu0 0.0
        %460 = vmatpush1.xpose.msra.mxu0 0.0
        %461 = vmatprep.subr.mxu0 0.0
        %462 = vmatpush1.xpose.msra.mxu0 0.0
        %463 = vmatprep.subr.mxu0 0.0
        %464 = vmatpush1.xpose.msra.mxu0 0.0
        %465 = vmatprep.subr.mxu0 0.0
        %466 = vmatpush1.xpose.msra.mxu0 0.0
        %467 = vmatprep.mubr.f32.mxu0 0.0
        %468 = vmatmul.mubr.f32.gmra.mrb[0].mxu0 %v398
        %v469 = vpop.f32.mrb[0].mxu0
        %v470 = vadd.f32 0.0, %v469
        %v471 = vpop.f32.mrb[0].mxu0
        %472 = vdwg.mxu0
        %v473 = vld [vmem:[%s2] sm:$0xff]
        %vm474 = vcmp.ne.f32.partialorder %v473, 0.0
        %v475 = vsel %vm474, %v470, -inf
        %vm476 = vcmask 64512
        %v477 = vsel %vm476, %v475, -inf
        %478 = vmax.xlane.f32.xlu0 %v477
        %v479 = vpop.xlane.xlu0 %478
        %v480 = vsub.f32 %v475, %v479
        %v481 = vmul.f32 %v480, 1.442695
        %v482 = vpow.pop %v481
        %v483 = vsel %vm476, %v482, 0.0
        %484 = vadd.xlane.f32.xlu0 %v483
        %v485 = vpop.xlane.xlu0 %484
        %v486 = vrcp.pop %v485
        %v487 = vmul.f32 %v482, %v486
        %v489 = vsel %vm476, %v487, 0
        %491 = vmatprep.subr.mxu0 0.0
        %492 = vmatpush1.msra.mxu0 %v393
        %493 = vmatprep.subr.mxu0 0.0
        %494 = vmatpush1.msra.mxu0 0.0
        %495 = vmatprep.subr.mxu0 0.0
        %496 = vmatpush1.msra.mxu0 0.0
        %497 = vmatprep.subr.mxu0 0.0
        %498 = vmatpush1.msra.mxu0 0.0
        %499 = vmatprep.subr.mxu0 0.0
        %500 = vmatpush1.msra.mxu0 0.0
        %501 = vmatprep.subr.mxu0 0.0
        %502 = vmatpush1.msra.mxu0 0.0
        %503 = vmatprep.subr.mxu0 0.0
        %504 = vmatpush1.msra.mxu0 0.0
        %505 = vmatprep.subr.mxu0 0.0
        %506 = vmatpush1.msra.mxu0 0.0
        %507 = vmatprep.subr.mxu0 0.0
        %508 = vmatpush1.msra.mxu0 0.0
        %509 = vmatprep.subr.mxu0 0.0
        %510 = vmatpush1.msra.mxu0 0.0
        %511 = vmatprep.subr.mxu0 0.0
        %512 = vmatpush1.msra.mxu0 0.0
        %513 = vmatprep.subr.mxu0 0.0
        %514 = vmatpush1.msra.mxu0 0.0
        %515 = vmatprep.subr.mxu0 0.0
        %516 = vmatpush1.msra.mxu0 0.0
        %517 = vmatprep.subr.mxu0 0.0
        %518 = vmatpush1.msra.mxu0 0.0
        %519 = vmatprep.subr.mxu0 0.0
        %520 = vmatpush1.msra.mxu0 0.0
        %521 = vmatprep.subr.mxu0 0.0
        %522 = vmatpush1.msra.mxu0 0.0
        %523 = vmatprep.subr.mxu0 0.0
        %524 = vmatpush1.msra.mxu0 0.0
        %525 = vmatprep.subr.mxu0 0.0
        %526 = vmatpush1.msra.mxu0 0.0
        %527 = vmatprep.subr.mxu0 0.0
        %528 = vmatpush1.msra.mxu0 0.0
        %529 = vmatprep.subr.mxu0 0.0
        %530 = vmatpush1.msra.mxu0 0.0
        %531 = vmatprep.subr.mxu0 0.0
        %532 = vmatpush1.msra.mxu0 0.0
        %533 = vmatprep.subr.mxu0 0.0
        %534 = vmatpush1.msra.mxu0 0.0
        %535 = vmatprep.subr.mxu0 0.0
        %536 = vmatpush1.msra.mxu0 0.0
        %537 = vmatprep.subr.mxu0 0.0
        %538 = vmatpush1.msra.mxu0 0.0
        %539 = vmatprep.subr.mxu0 0.0
        %540 = vmatpush1.msra.mxu0 0.0
        %541 = vmatprep.subr.mxu0 0.0
        %542 = vmatpush1.msra.mxu0 0.0
        %543 = vmatprep.subr.mxu0 0.0
        %544 = vmatpush1.msra.mxu0 0.0
        %545 = vmatprep.subr.mxu0 0.0
        %546 = vmatpush1.msra.mxu0 0.0
        %547 = vmatprep.subr.mxu0 0.0
        %548 = vmatpush1.msra.mxu0 0.0
        %549 = vmatprep.subr.mxu0 0.0
        %550 = vmatpush1.msra.mxu0 0.0
        %551 = vmatprep.subr.mxu0 0.0
        %552 = vmatpush1.msra.mxu0 0.0
        %553 = vmatprep.subr.mxu0 0.0
        %554 = vmatpush1.msra.mxu0 0.0
        %555 = vmatprep.mubr.f32.mxu0 0.0
        %556 = vmatmul.mubr.f32.gmra.mrb[0].mxu0 %v489
        %v557 = vpop.f32.mrb[0].mxu0
        %v558 = vadd.f32 0.0, %v557
        %v559 = vpop.f32.mrb[0].mxu0
        %560 = vdwg.mxu0
        %561 = vst.msk [vmem:[%s161] sm:$0xff] %vm396, %v558
        %s562 = sand.u32 %s93, 1
        %s563 = scalar_lea.sflag [#allocation3], %s562
        %s564 = sand.u32 %s93, 1
        %s565 = smul.addr %s564, 8
        %s566 = scalar_lea.vmem [#allocation2], %s565
        // Predicated region
        $region33: #{tpu_custom_call.1} parent=31 // pred_check
          %p567 = pneg %p103
        $region34: #{tpu_custom_call.1} parent=31 // pred_check_branch
          %569 = sbr.rel (%p567) target = $region36
        $region35: #{tpu_custom_call.1} parent=31 // pred_region
          %s571 = ssub.s32 128, 128
          %572 = vsyncadd %s563, %s571
          %s573 = smul.addr %s17, 128
          %s574 = scalar_lea.hbm %s3, %s573
          %s576 = sshll.u32 %s566, 4
          %s577 = int_to_ptr.vmem [resolvable:$true] %s576
          %579 = dma.vmem_to_hbm [thread:$0]  %s577, 128, %s574, %s563
        $region36: #{tpu_custom_call.1} parent=31 // pred_fallthru
          _
      $region32: #{tpu_custom_call.1} parent=5 // pred_fallthru
        _
      %p580 = scmp.le.s32.totalorder 2, %s12
      // Predicated region
      $region37: #{tpu_custom_call.1} parent=5 // pred_check
        %p581 = pneg %p580
      $region38: #{tpu_custom_call.1} parent=5 // pred_check_branch
        %583 = sbr.rel (%p581) target = $region40
      $region39: #{tpu_custom_call.1} parent=5 // pred_region
        %s584 = ssub.s32 %s12, 2
        // Predicated region
        $region41: #{tpu_custom_call.1} parent=39 // pred_check
          %p585 = pneg %p109
        $region42: #{tpu_custom_call.1} parent=39 // pred_check_branch
          %587 = sbr.rel (%p585) target = $region44
        $region43: #{tpu_custom_call.1} parent=39 // pred_region
          %s588 = sand.u32 %s94, 1
          %s589 = scalar_lea.sflag [#allocation3], %s588
          %s590 = sand.u32 %s94, 1
          %s591 = smul.addr %s590, 8
          %s592 = scalar_lea.vmem [#allocation2], %s591
          %593 = dma.done %s589, 128
        $region44: #{tpu_custom_call.1} parent=39 // pred_fallthru
          _
      $region40: #{tpu_custom_call.1} parent=5 // pred_fallthru
        _
    $region6: #{tpu_custom_call.1} parent=1 // loop_footer
      %s16 = sadd.s32 1, %s12
    $region7: #{tpu_custom_call.1} parent=1 // loop_footer_branch
      %11 = sbr.rel target = $region3
    $region8: #{tpu_custom_call.1} parent=1 // loop_exit
      _
    %594 = vsyncpa [#allocation3], 1
    %s595 = scalar_lea.sflag [#allocation3], 1
    %596 = vsyncpa %s595, 1

</llo_original>
